<compile_context>
chip_gen: v7x
topology: tpu7x:2x2x1
jax: 0.10.0
libtpu: 0.0.40
codegen_flags: <defaults>
</compile_context>

<pallas_src>
import numpy as np
import jax
import jax.numpy as jnp
from jax.experimental import pallas as pl
from jax.experimental.pallas import tpu as pltpu

_EPS = float(np.finfo(float).eps)  # matches the torch code's np.finfo(float).eps
_LANE = 128
_SUB = 8        # sublanes per f32 vreg
_CHUNK = 1024   # rows per in-kernel reduction chunk (0.5 MiB f32)


def _pow_gamma(u, gamma):
    """u ** gamma, using repeated multiplication for small integral gamma."""
    g = float(gamma)
    if g.is_integer() and 0.0 <= g <= 8.0:
        gi = int(g)
        if gi == 0:
            return jnp.ones_like(u)
        r = u
        for _ in range(gi - 1):
            r = r * u
        return r
    return u ** jnp.float32(g)


def _focal_elem(x_f32, is_pos, alpha, gamma):
    """Elementwise focal loss in fp32; sign and alpha folded into one coef."""
    p_t = jnp.where(is_pos, x_f32, 1.0 - x_f32)
    coef = jnp.where(is_pos, jnp.float32(-alpha), jnp.float32(-(1.0 - alpha)))
    return coef * _pow_gamma(1.0 - p_t, gamma) * jnp.log(p_t + _EPS)


def _sum_kernel_factory(alpha, gamma, tile, chunk, n_valid, needs_mask):
    """Per-block (8, 128) partial sums via a chunked fori_loop reduction."""
    n_chunks = tile // chunk  # static; tile is a multiple of chunk

    def kernel(x_ref, t_ref, partial_ref):
        blk_row0 = pl.program_id(0) * tile
        if needs_mask:
            # Hoisted iotas (JAX does not CSE broadcast_in_dim inside loops).
            row_l = jax.lax.broadcasted_iota(jnp.int32, (chunk, _LANE), 0)
            lane = jax.lax.broadcasted_iota(jnp.int32, (chunk, _LANE), 1)
            flat_base = row_l * _LANE + lane

        def chunk_sum(c):
            r0 = pl.multiple_of(c * chunk, chunk)
            x = x_ref[pl.ds(r0, chunk), :].astype(jnp.float32)
            t = t_ref[pl.ds(r0, chunk), :]
            is_pos = t == jnp.asarray(1, t.dtype)      # native-dtype compare
            fl = _focal_elem(x, is_pos, alpha, gamma)
            if needs_mask:
                # Mask both the 128-pad tail and Pallas-padded ragged rows.
                flat = (blk_row0 + r0) * _LANE + flat_base
                fl = jnp.where(flat < n_valid, fl, 0.0)
            # Fold chunk rows into one (8, 128) vreg-shaped sum: pure VPU
            # adds across vregs, no cross-lane XLU work.
            return fl.reshape(chunk // _SUB, _SUB, _LANE).sum(axis=0)

        if n_chunks == 1:
            partial_ref[...] = chunk_sum(0)
        else:
            partial_ref[...] = jax.lax.fori_loop(
                1, n_chunks, lambda c, acc: acc + chunk_sum(c), chunk_sum(0),
                unroll=True)

    return kernel


def _none_kernel_factory(alpha, gamma, tile, n_valid, ragged):
    def kernel(x_ref, t_ref, out_ref):
        x = x_ref[...].astype(jnp.float32)
        t = t_ref[...]
        is_pos = t == jnp.asarray(1, t.dtype)          # native-dtype compare
        fl = _focal_elem(x, is_pos, alpha, gamma)
        if ragged:
            # Zero Pallas-padded garbage rows of the ragged last block so no
            # NaN/Inf is ever materialized (the writeback is clipped anyway).
            row0 = pl.program_id(0) * tile
            ridx = row0 + jax.lax.broadcasted_iota(jnp.int32, (tile, _LANE), 0)
            lane = jax.lax.broadcasted_iota(jnp.int32, (tile, _LANE), 1)
            fl = jnp.where(ridx * _LANE + lane < n_valid, fl, 0.0)
        out_ref[...] = fl.astype(out_ref.dtype)

    return kernel


def _as_rows128(arr):
    """Flatten to (rows, 128); zero-pad only if n % 128 != 0 (<=127 elems)."""
    flat = arr.reshape(-1)
    n_pad = (-flat.shape[0]) % _LANE
    if n_pad:
        flat = jnp.pad(flat, (0, n_pad))
    return flat.reshape(-1, _LANE)


def _round_up(v, m):
    return ((v + m - 1) // m) * m


def _pick_tile(rows, tile_rows):
    tile = min(max(_SUB, int(tile_rows)), _round_up(rows, _SUB))
    if tile > _CHUNK:
        tile = (tile // _CHUNK) * _CHUNK  # multiple of the reduction chunk
        # Keep >= ~4 grid steps when there's enough work so both v7x
        # TensorCores get shards under dimension_semantics=("parallel",).
        tile = min(tile, max(_CHUNK, _round_up(pl.cdiv(rows, 4), _CHUNK)))
    return max(_SUB, (tile // _SUB) * _SUB)


def focal_loss(x, target, alpha=1.0, gamma=2.0, reduction="mean",
               tile_rows=8192):
    if reduction not in ("mean", "sum", "none"):
        raise NotImplementedError(f"Reduction {reduction} not implemented.")

    n = x.size
    xf = _as_rows128(x)
    tf = _as_rows128(target)
    rows = xf.shape[0]

    alpha_f = float(alpha)
    gamma_f = float(gamma)
    cparams = pltpu.CompilerParams(
        dimension_semantics=("parallel",),
        vmem_limit_bytes=48 * 1024 * 1024,
    )

    if reduction == "none":
        tile = _pick_tile(rows, min(int(tile_rows), 4096))  # 3 streams in VMEM
        grid = (pl.cdiv(rows, tile),)
        ragged = (rows % tile) != 0
        out = pl.pallas_call(
            _none_kernel_factory(alpha_f, gamma_f, tile, n, ragged),
            out_shape=jax.ShapeDtypeStruct((rows, _LANE), x.dtype),
            grid_spec=pltpu.PrefetchScalarGridSpec(
                num_scalar_prefetch=0,
                grid=grid,
                in_specs=[
                    pl.BlockSpec((tile, _LANE), lambda i: (i, 0)),
                    pl.BlockSpec((tile, _LANE), lambda i: (i, 0)),
                ],
                out_specs=pl.BlockSpec((tile, _LANE), lambda i: (i, 0)),
            ),
            compiler_params=cparams,
        )(xf, tf)
        if rows * _LANE == n:          # 128-aligned: pure (free) reshape back
            return out.reshape(x.shape)
        return out.reshape(-1)[:n].reshape(x.shape)

    # mean / sum: per-block (8, 128) vector partial sums, reduced in wrapper.
    tile = _pick_tile(rows, tile_rows)
    chunk = min(tile, _CHUNK)
    grid = (pl.cdiv(rows, tile),)
    num_blocks = grid[0]
    needs_mask = (rows * _LANE != n) or (rows % tile != 0)

    partials = pl.pallas_call(
        _sum_kernel_factory(alpha_f, gamma_f, tile, chunk, n, needs_mask),
        out_shape=jax.ShapeDtypeStruct((num_blocks, _SUB, _LANE), jnp.float32),
        grid_spec=pltpu.PrefetchScalarGridSpec(
            num_scalar_prefetch=0,
            grid=grid,
            in_specs=[
                pl.BlockSpec((tile, _LANE), lambda i: (i, 0)),
                pl.BlockSpec((tile, _LANE), lambda i: (i, 0)),
            ],
            out_specs=pl.BlockSpec((None, _SUB, _LANE), lambda i: (i, 0, 0)),
        ),
        compiler_params=cparams,
    )(xf, tf)

    total = jnp.sum(partials)          # tiny (num_blocks, 8, 128) reduce
    if reduction == "mean":
        total = total / jnp.float32(n)
    return total.astype(x.dtype)


def _focal_loss_ref(x, target, alpha=1.0, gamma=2.0, reduction="mean"):
    """Literal transcription of the torch forward, in fp32."""
    xf = x.astype(jnp.float32)
    tf = target.astype(jnp.float32)
    p_t = jnp.where(tf == 1, xf, 1.0 - xf)
    fl = -1.0 * (1.0 - p_t) ** gamma * jnp.log(p_t + _EPS)
    fl = jnp.where(tf == 1, fl * alpha, fl * (1.0 - alpha))
    if reduction == "mean":
        return fl.mean()
    if reduction == "sum":
        return fl.sum()
    return fl


if __name__ == "__main__":
    key = jax.random.PRNGKey(0)
    kx, kt = jax.random.split(key)

    # x: predicted probabilities in (0, 1), target: binary labels {0, 1}
    shape = (2, 4, 16, 16)  # NCHW-style input, loss is elementwise
    x = jax.random.uniform(kx, shape, dtype=jnp.float32, minval=0.01, maxval=0.99)
    target = (jax.random.uniform(kt, shape) > 0.5).astype(jnp.float32)

    # 'mean' path (128-aligned: no wrapper-side pad/copy)
    out = jax.block_until_ready(focal_loss(x, target, alpha=1.0, gamma=2.0,
                                           reduction="mean"))
    ref = _focal_loss_ref(x, target, alpha=1.0, gamma=2.0, reduction="mean")
    assert jnp.allclose(out, ref, rtol=1e-5, atol=1e-5), (out, ref)

    # 'sum' path
    out_sum = jax.block_until_ready(focal_loss(x, target, reduction="sum"))
    ref_sum = _focal_loss_ref(x, target, reduction="sum")
    assert jnp.allclose(out_sum, ref_sum, rtol=1e-5, atol=1e-3), (out_sum, ref_sum)

    # 'none' path
    out_none = jax.block_until_ready(focal_loss(x, target, reduction="none"))
    ref_none = _focal_loss_ref(x, target, reduction="none")
    assert out_none.shape == shape
    assert jnp.allclose(out_none, ref_none, rtol=1e-5, atol=1e-5)

    # non-128-aligned shape + non-default alpha (exercises padded tail,
    # ragged last block masking, and the 'none' slice-back path)
    shape2 = (3, 5, 7, 11)
    x2 = jax.random.uniform(kx, shape2, dtype=jnp.float32, minval=0.01, maxval=0.99)
    t2 = (jax.random.uniform(kt, shape2) > 0.5).astype(jnp.float32)
    o2 = jax.block_until_ready(
        focal_loss(x2, t2, alpha=0.25, gamma=2.0, reduction="mean"))
    r2 = _focal_loss_ref(x2, t2, alpha=0.25, gamma=2.0, reduction="mean")
    assert jnp.allclose(o2, r2, rtol=1e-5, atol=1e-5), (o2, r2)

    o2n = jax.block_until_ready(
        focal_loss(x2, t2, alpha=0.25, gamma=2.0, reduction="none"))
    r2n = _focal_loss_ref(x2, t2, alpha=0.25, gamma=2.0, reduction="none")
    assert o2n.shape == shape2
    assert jnp.allclose(o2n, r2n, rtol=1e-5, atol=1e-5)

    print("KERNEL_OK")
</pallas_src>

<mosaic_0001>
module attributes {stable_mosaic.version = 11 : i64} {
  func.func @kernel(%arg0: i32, %arg1: memref<16x128xf32, #tpu.memory_space<vmem>>, %arg2: memref<16x128xf32, #tpu.memory_space<vmem>>, %arg3: memref<1x8x128xf32, #tpu.memory_space<vmem>>) attributes {dimension_semantics = [#tpu.dimension_semantics<parallel>], iteration_bounds = array<i64: 1>, scalar_prefetch = 0 : i64, scratch_operands = 0 : i64, tpu.core_type = #tpu.core_type<tc>, window_params = [{transform_indices = @transform_0, window_bounds = array<i64: 16, 128>}, {transform_indices = @transform_1, window_bounds = array<i64: 16, 128>}, {transform_indices = @transform_2, window_bounds = array<i64: 1, 8, 128>}]} {
    %c0_i32 = arith.constant 0 : i32
    %0 = tpu.assume_multiple %c0_i32, 16 : i32
    %1 = arith.index_cast %0 : i32 to index
    %c0 = arith.constant 0 : index
    %2 = vector.load %arg1[%1, %c0] : memref<16x128xf32, #tpu.memory_space<vmem>>, vector<16x128xf32>
    %3 = arith.index_cast %0 : i32 to index
    %c0_0 = arith.constant 0 : index
    %4 = vector.load %arg2[%3, %c0_0] : memref<16x128xf32, #tpu.memory_space<vmem>>, vector<16x128xf32>
    %cst = arith.constant 1.000000e+00 : f32
    %5 = vector.broadcast %cst : f32 to vector<16x128xf32>
    %6 = arith.cmpf oeq, %4, %5 : vector<16x128xf32>
    %cst_1 = arith.constant 1.000000e+00 : f32
    %7 = vector.broadcast %cst_1 : f32 to vector<16x128xf32>
    %8 = arith.subf %7, %2 : vector<16x128xf32>
    %9 = arith.select %6, %2, %8 : vector<16x128xi1>, vector<16x128xf32>
    %cst_2 = arith.constant -1.000000e+00 : f32
    %cst_3 = arith.constant -0.000000e+00 : f32
    %10 = vector.broadcast %cst_2 : f32 to vector<16x128xf32>
    %11 = vector.broadcast %cst_3 : f32 to vector<16x128xf32>
    %12 = arith.select %6, %10, %11 : vector<16x128xi1>, vector<16x128xf32>
    %cst_4 = arith.constant 1.000000e+00 : f32
    %13 = vector.broadcast %cst_4 : f32 to vector<16x128xf32>
    %14 = arith.subf %13, %9 : vector<16x128xf32>
    %15 = arith.mulf %14, %14 : vector<16x128xf32>
    %16 = arith.mulf %12, %15 : vector<16x128xf32>
    %cst_5 = arith.constant 2.22044605E-16 : f32
    %17 = vector.broadcast %cst_5 : f32 to vector<16x128xf32>
    %18 = arith.addf %9, %17 : vector<16x128xf32>
    %19 = math.log %18 : vector<16x128xf32>
    %20 = arith.mulf %16, %19 : vector<16x128xf32>
    %21 = vector.shape_cast %20 : vector<16x128xf32> to vector<2x8x128xf32>
    %cst_6 = arith.constant dense<0.000000e+00> : vector<8x128xf32>
    %22 = vector.multi_reduction <add>, %21, %cst_6 [0] : vector<2x8x128xf32> to vector<8x128xf32>
    %c0_7 = arith.constant 0 : index
    %c0_8 = arith.constant 0 : index
    %c0_9 = arith.constant 0 : index
    %23 = vector.load %arg3[%c0_7, %c0_8, %c0_9] : memref<1x8x128xf32, #tpu.memory_space<vmem>>, vector<1x8x128xf32>
    %24 = vector.shape_cast %23 : vector<1x8x128xf32> to vector<8x128xf32>
    %25 = vector.shape_cast %22 : vector<8x128xf32> to vector<1x8x128xf32>
    tpu.vector_store %arg3[%c0_7, %c0_8, %c0_9], %25 {strides = array<i32>} : memref<1x8x128xf32, #tpu.memory_space<vmem>>, vector<1x8x128xf32>,
    return
  }
  func.func @transform_0(%arg0: i32) -> (i32, i32) {
    %c0_i32 = arith.constant 0 : i32
    %c0_i32_0 = arith.constant 0 : i32
    return %arg0, %c0_i32 : i32, i32
  }
  func.func @transform_1(%arg0: i32) -> (i32, i32) {
    %c0_i32 = arith.constant 0 : i32
    %c0_i32_0 = arith.constant 0 : i32
    return %arg0, %c0_i32 : i32, i32
  }
  func.func @transform_2(%arg0: i32) -> (i32, i32, i32) {
    %c0_i32 = arith.constant 0 : i32
    %c0_i32_0 = arith.constant 0 : i32
    %c0_i32_1 = arith.constant 0 : i32
    return %arg0, %c0_i32, %c0_i32_0 : i32, i32, i32
  }
}

</mosaic_0001>

<llo_original>
// kernel: tpu_custom_call.1
$region0: #{tpu_custom_call.1}
  #allocation0 [shape = 'u32[]', space=smem, size = 0x4, offset = 0x4, fixed_abs, tag = 'smem constant byte address 0x4 - core index']
  #allocation1 [shape = 'u32[144,128]{1,0:T(1,128)}', space=vmem, size = 0x12000, scoped, tag = 'internal scratch']
  %s0 = inlined_call_operand.hbm [shape: f32[16,128], index: 0, kind: input, shape index: {}]
  %s1 = inlined_call_operand.hbm [shape: f32[16,128], index: 1, kind: input, shape index: {}]
  %s2 = inlined_call_operand.hbm [shape: f32[1,8,128], index: 2, kind: output, shape index: {}]
  %s3 = sld [smem:[#allocation0]]
  $region26: #{tpu_custom_call.1} parent=0
    _
  %s5 = ssub.s32 1, %s3
  %s6 = scalar_select 0, %s5, %s3
  $region1: #{tpu_custom_call.1} parent=0
    #allocation2 [shape = 'u8[8192]{0}', space=vmem, size = 0x2000, scoped, tag = 'input window, operand 0, single buffered']
    #allocation3 [shape = 's32[1]{0}', space=sflag, size = 0x4, scoped, tag = 'scoped memory for tpu_custom_call.1']
    #allocation4 [shape = 's32[1]{0}', space=sflag, size = 0x4, scoped, tag = 'scoped memory for tpu_custom_call.1']
    #allocation5 [shape = 'u8[8192]{0}', space=vmem, size = 0x2000, scoped, tag = 'input window, operand 1, single buffered']
    #allocation6 [shape = 's32[1]{0}', space=sflag, size = 0x4, scoped, tag = 'scoped memory for tpu_custom_call.1']
    #allocation7 [shape = 'u8[4096]{0}', space=vmem, size = 0x1000, scoped, tag = 'output window, operand 0, single buffered']
    %7 = vsyncpa [#allocation3], 0
    %8 = vsyncpa [#allocation6], 0
    %9 = vsyncpa [#allocation4], 0
    // Predicated region
    $region2: #{tpu_custom_call.1} parent=1 // pred_check
      _
    $region3: #{tpu_custom_call.1} parent=1 // pred_check_branch
      %11 = sbr.rel (0) target = $region5
    $region4: #{tpu_custom_call.1} parent=1 // pred_region
      %s13 = ssub.s32 256, 256
      %14 = vsyncadd [#allocation3], %s13
      %s15 = sshll.u32 [#allocation2], 4
      %s16 = int_to_ptr.vmem [resolvable:$true] %s15
      %21 = dma.hbm_to_vmem [thread:$0]  %s0, 256, %s16, [#allocation3], 128, 128, 8
    $region5: #{tpu_custom_call.1} parent=1 // pred_fallthru
      _
    // Predicated region
    $region6: #{tpu_custom_call.1} parent=1 // pred_check
      _
    $region7: #{tpu_custom_call.1} parent=1 // pred_check_branch
      %23 = sbr.rel (0) target = $region9
    $region8: #{tpu_custom_call.1} parent=1 // pred_region
      %s25 = ssub.s32 256, 256
      %26 = vsyncadd [#allocation6], %s25
      %s27 = sshll.u32 [#allocation5], 4
      %s28 = int_to_ptr.vmem [resolvable:$true] %s27
      %33 = dma.hbm_to_vmem [thread:$0]  %s1, 256, %s28, [#allocation6], 128, 128, 8
    $region9: #{tpu_custom_call.1} parent=1 // pred_fallthru
      _
    // Predicated region
    $region10: #{tpu_custom_call.1} parent=1 // pred_check
      _
    $region11: #{tpu_custom_call.1} parent=1 // pred_check_branch
      %35 = sbr.rel (0) target = $region13
    $region12: #{tpu_custom_call.1} parent=1 // pred_region
      %36 = dma.done [#allocation3], 256
    $region13: #{tpu_custom_call.1} parent=1 // pred_fallthru
      _
    // Predicated region
    $region14: #{tpu_custom_call.1} parent=1 // pred_check
      _
    $region15: #{tpu_custom_call.1} parent=1 // pred_check_branch
      %38 = sbr.rel (0) target = $region17
    $region16: #{tpu_custom_call.1} parent=1 // pred_region
      %39 = dma.done [#allocation6], 256
    $region17: #{tpu_custom_call.1} parent=1 // pred_fallthru
      _
    %v40 = vld [vmem:[#allocation2] sm:$0xff]
    %v41 = vld [vmem:[#allocation2 + $0x8] sm:$0xff]
    %v42 = vld [vmem:[#allocation5] sm:$0xff]
    %v43 = vld [vmem:[#allocation5 + $0x8] sm:$0xff]
    %vm44 = vcmp.eq.f32.partialorder %v42, 1.0
    %vm45 = vcmp.eq.f32.partialorder %v43, 1.0
    %v46 = vsub.f32 1.0, %v40
    %v47 = vsub.f32 1.0, %v41
    %v48 = vsel %vm44, %v40, %v46
    %v49 = vsel %vm45, %v41, %v47
    %v50 = vsel %vm44, -1.0, -0.0
    %v51 = vsel %vm45, -1.0, -0.0
    %v52 = vsub.f32 1.0, %v48
    %v53 = vsub.f32 1.0, %v49
    %v54 = vmul.f32 %v52, %v52
    %v55 = vmul.f32 %v53, %v53
    %v56 = vmul.f32 %v50, %v54
    %v57 = vmul.f32 %v51, %v55
    %v58 = vadd.f32 %v48, 2.220446e-16
    %v59 = vadd.f32 %v49, 2.220446e-16
    %v60 = vlog2.pop %v58
    %v61 = vmul.f32 %v60, 0.6931472
    %v62 = vlog2.pop %v59
    %v63 = vmul.f32 %v62, 0.6931472
    %v64 = vmul.f32 %v56, %v61
    %v65 = vmul.f32 %v57, %v63
    %v66 = vadd.f32 %v64, %v65
    %67 = vst [vmem:[#allocation7] sm:$0xff] %v66
    // Predicated region
    $region18: #{tpu_custom_call.1} parent=1 // pred_check
      _
    $region19: #{tpu_custom_call.1} parent=1 // pred_check_branch
      %69 = sbr.rel (0) target = $region21
    $region20: #{tpu_custom_call.1} parent=1 // pred_region
      %s71 = ssub.s32 128, 128
      %72 = vsyncadd [#allocation4], %s71
      %s74 = sshll.u32 [#allocation7], 4
      %s75 = int_to_ptr.vmem [resolvable:$true] %s74
      %77 = dma.vmem_to_hbm [thread:$0]  %s75, 128, %s2, [#allocation4]
    $region21: #{tpu_custom_call.1} parent=1 // pred_fallthru
      _
    // Predicated region
    $region22: #{tpu_custom_call.1} parent=1 // pred_check
      _
    $region23: #{tpu_custom_call.1} parent=1 // pred_check_branch
      %79 = sbr.rel (0) target = $region25
    $region24: #{tpu_custom_call.1} parent=1 // pred_region
      %80 = dma.done [#allocation4], 128
    $region25: #{tpu_custom_call.1} parent=1 // pred_fallthru
      _
    %81 = vsyncpa [#allocation3], 1
    %82 = vsyncpa [#allocation6], 1
    %83 = vsyncpa [#allocation4], 1

</llo_original>
